<compile_context>
chip_gen: v5e
topology: v5e:2x2
jax: 0.10.0
libtpu: 0.0.40
codegen_flags: <defaults>
</compile_context>

<pallas_src>
import jax
import jax.numpy as jnp
from jax.experimental import pallas as pl
from jax.experimental.pallas import tpu as pltpu

_LANE = 128
_SUBLANE = 8
_TM_MAX = 1024


def _round_up(n, m):
    return ((n + m - 1) // m) * m


def _leaky_relu(x, slope=0.1):
    return jnp.where(x > 0, x, slope * x)


def _choose_tm(b):
    """Batch tile: big enough to amortize per-grid-step overhead, small enough
    to keep >=2 grid steps (v7x 2-TC sharding) when the batch allows."""
    if b <= 2 * _SUBLANE:
        return b  # single tiny block; block row dim == full array dim is legal
    n_tiles = max(2, pl.cdiv(b, _TM_MAX))
    return _round_up(pl.cdiv(b, n_tiles), _SUBLANE)


def _mlp_kernel(x_ref, w1_ref, b1_ref, w2_ref, b2_ref, w3_ref, b3_ref, out_ref):
    # x arrives as f32; cast to bf16 on the VPU (VALU has slack, kernel is
    # HBM-bound), feed the MXU bf16 inputs with f32 accumulation.
    x = x_ref[...].astype(jnp.bfloat16)

    # Linear(256, 256) + LeakyReLU(0.1)
    h1 = jnp.dot(x, w1_ref[...], preferred_element_type=jnp.float32) + b1_ref[...]
    h1 = _leaky_relu(h1).astype(jnp.bfloat16)

    # Linear(256, 128) + LeakyReLU(0.1)
    h2 = jnp.dot(h1, w2_ref[...], preferred_element_type=jnp.float32) + b2_ref[...]
    h2 = _leaky_relu(h2).astype(jnp.bfloat16)

    # Linear(128, O_pad)
    out = jnp.dot(h2, w3_ref[...], preferred_element_type=jnp.float32) + b3_ref[...]
    out_ref[...] = out.astype(out_ref.dtype)


def init_params(key, output_size):
    """Deterministic init matching the layer shapes of CurrentObjPredict.__init__.

    PyTorch Linear stores weight as (out, in); we store transposed (in, out).
    """
    ks = jax.random.split(key, 6)

    def lin(kw, kb, fan_in, fan_out):
        bound = 1.0 / jnp.sqrt(fan_in)
        w = jax.random.uniform(kw, (fan_in, fan_out), jnp.float32, -bound, bound)
        b = jax.random.uniform(kb, (1, fan_out), jnp.float32, -bound, bound)
        return w, b

    w1, b1 = lin(ks[0], ks[1], 256, 256)
    w2, b2 = lin(ks[2], ks[3], 256, 128)
    w3, b3 = lin(ks[4], ks[5], 128, output_size)
    return {"w1": w1, "b1": b1, "w2": w2, "b2": b2, "w3": w3, "b3": b3}


def pack_params(params):
    """Kernel-side parameter layout: bf16 weights, f32 biases, lane-padded layer 3."""
    output_size = params["w3"].shape[1]
    o_pad = _round_up(max(output_size, _LANE), _LANE)

    w3p = jnp.zeros((128, o_pad), jnp.float32).at[:, :output_size].set(params["w3"])
    b3p = jnp.zeros((1, o_pad), jnp.float32).at[:, :output_size].set(params["b3"])

    return {
        "w1": params["w1"].astype(jnp.bfloat16),
        "b1": params["b1"].astype(jnp.float32),
        "w2": params["w2"].astype(jnp.bfloat16),
        "b2": params["b2"].astype(jnp.float32),
        "w3": w3p.astype(jnp.bfloat16),
        "b3": b3p,
        "output_size": output_size,
    }


def current_obj_predict(input_vector, packed, out_dtype=jnp.bfloat16):
    """Forward pass of CurrentObjPredict.

    input_vector: any shape (B, ...) whose trailing dims flatten to 256 (f32).
    packed: output of pack_params().
    out_dtype: dtype of the returned activations (bf16 default; use jnp.float32
               if downstream consumers need full precision).
    """
    b = input_vector.shape[0]
    x = input_vector.reshape(b, -1)
    assert x.shape[1] == 256, f"expected 256 flattened features, got {x.shape[1]}"

    out_size = packed["output_size"]
    o_pad = packed["w3"].shape[1]

    tm = _choose_tm(b)
    grid = (pl.cdiv(b, tm),)
    x_bytes = jnp.dtype(x.dtype).itemsize
    out_bytes = jnp.dtype(out_dtype).itemsize

    flops = 2 * b * (256 * 256 + 256 * 128 + 128 * o_pad)
    bytes_accessed = (
        b * 256 * x_bytes                              # x (kernel dtype, usually f32)
        + (256 * 256 + 256 * 128 + 128 * o_pad) * 2    # weights (bf16, read once)
        + (256 + 128 + o_pad) * 4                      # biases (f32)
        + b * o_pad * out_bytes                        # output
    )

    out = pl.pallas_call(
        _mlp_kernel,
        out_shape=jax.ShapeDtypeStruct((b, o_pad), out_dtype),
        grid_spec=pltpu.PrefetchScalarGridSpec(
            num_scalar_prefetch=0,
            grid=grid,
            in_specs=[
                pl.BlockSpec((tm, 256), lambda i: (i, 0)),       # x: tiled over batch
                pl.BlockSpec((256, 256), lambda i: (0, 0)),      # w1: VMEM-resident
                pl.BlockSpec((1, 256), lambda i: (0, 0)),        # b1
                pl.BlockSpec((256, 128), lambda i: (0, 0)),      # w2
                pl.BlockSpec((1, 128), lambda i: (0, 0)),        # b2
                pl.BlockSpec((128, o_pad), lambda i: (0, 0)),    # w3 (lane-padded)
                pl.BlockSpec((1, o_pad), lambda i: (0, 0)),      # b3 (lane-padded)
            ],
            out_specs=pl.BlockSpec((tm, o_pad), lambda i: (i, 0)),
        ),
        compiler_params=pltpu.CompilerParams(
            dimension_semantics=("parallel",),  # 2-TC sharding on v7x (>=2 steps)
        ),
        cost_estimate=pl.CostEstimate(
            flops=flops, transcendentals=0, bytes_accessed=bytes_accessed
        ),
    )(x, packed["w1"], packed["b1"], packed["w2"], packed["b2"],
      packed["w3"], packed["b3"])

    return out[:, :out_size]


def _reference(x, params):
    """Pure-JAX reference mimicking the kernel's bf16 input/activation/weight
    quantization (f32 accumulation otherwise), for a tight correctness check.
    Note: a true f32 PyTorch CurrentObjPredict will differ by the bf16
    quantization error (~3 decimal digits)."""
    def bf(v):
        return v.astype(jnp.bfloat16).astype(jnp.float32)

    h = bf(x.reshape(x.shape[0], -1))
    h = h @ bf(params["w1"]) + params["b1"]
    h = jnp.where(h > 0, h, 0.1 * h)
    h = bf(h) @ bf(params["w2"]) + params["b2"]
    h = jnp.where(h > 0, h, 0.1 * h)
    return bf(h) @ bf(params["w3"]) + params["b3"]


if __name__ == "__main__":
    key = jax.random.PRNGKey(0)
    k_in, k_param = jax.random.split(key)

    output_size = 32
    batch = 2
    # Input: anything that flattens to 256 features per example, e.g. (B, 4, 8, 8).
    x = jax.random.normal(k_in, (batch, 4, 8, 8), dtype=jnp.float32)

    params = init_params(k_param, output_size)
    packed = pack_params(params)

    out_bf16 = current_obj_predict(x, packed)                          # default bf16 out
    out_f32 = current_obj_predict(x, packed, out_dtype=jnp.float32)    # f32 out path
    out_bf16, out_f32 = jax.block_until_ready((out_bf16, out_f32))

    ref = _reference(x, params)

    assert out_bf16.shape == (batch, output_size), out_bf16.shape
    assert out_bf16.dtype == jnp.bfloat16, out_bf16.dtype
    assert out_f32.shape == (batch, output_size), out_f32.shape
    assert jnp.allclose(out_f32, ref, atol=2e-3, rtol=2e-3), "f32-out mismatch vs reference"
    assert jnp.allclose(out_bf16.astype(jnp.float32), ref, atol=2e-2, rtol=2e-2), \
        "bf16-out mismatch vs reference"

    print("KERNEL_OK")
</pallas_src>

<mosaic_0001>
module attributes {stable_mosaic.version = 11 : i64} {
  func.func @_mlp_kernel(%arg0: i32, %arg1: memref<2x256xf32, #tpu.memory_space<vmem>>, %arg2: memref<256x256xbf16, #tpu.memory_space<vmem>>, %arg3: memref<1x256xf32, #tpu.memory_space<vmem>>, %arg4: memref<256x128xbf16, #tpu.memory_space<vmem>>, %arg5: memref<1x128xf32, #tpu.memory_space<vmem>>, %arg6: memref<128x128xbf16, #tpu.memory_space<vmem>>, %arg7: memref<1x128xf32, #tpu.memory_space<vmem>>, %arg8: memref<2x128xbf16, #tpu.memory_space<vmem>>) attributes {dimension_semantics = [#tpu.dimension_semantics<parallel>], iteration_bounds = array<i64: 1>, scalar_prefetch = 0 : i64, scratch_operands = 0 : i64, tpu.core_type = #tpu.core_type<tc>, window_params = [{transform_indices = @transform_0, window_bounds = array<i64: 2, 256>}, {pipeline_mode = #tpu.pipeline_mode<synchronous>, transform_indices = @transform_1, window_bounds = array<i64: 256, 256>}, {pipeline_mode = #tpu.pipeline_mode<synchronous>, transform_indices = @transform_2, window_bounds = array<i64: 1, 256>}, {pipeline_mode = #tpu.pipeline_mode<synchronous>, transform_indices = @transform_3, window_bounds = array<i64: 256, 128>}, {pipeline_mode = #tpu.pipeline_mode<synchronous>, transform_indices = @transform_4, window_bounds = array<i64: 1, 128>}, {pipeline_mode = #tpu.pipeline_mode<synchronous>, transform_indices = @transform_5, window_bounds = array<i64: 128, 128>}, {pipeline_mode = #tpu.pipeline_mode<synchronous>, transform_indices = @transform_6, window_bounds = array<i64: 1, 128>}, {transform_indices = @transform_7, window_bounds = array<i64: 2, 128>}]} {
    %c0 = arith.constant 0 : index
    %c0_0 = arith.constant 0 : index
    %0 = vector.load %arg1[%c0, %c0_0] : memref<2x256xf32, #tpu.memory_space<vmem>>, vector<2x256xf32>
    %1 = arith.truncf %0 : vector<2x256xf32> to vector<2x256xbf16>
    %c0_1 = arith.constant 0 : index
    %c0_2 = arith.constant 0 : index
    %2 = vector.load %arg2[%c0_1, %c0_2] : memref<256x256xbf16, #tpu.memory_space<vmem>>, vector<256x256xbf16>
    %cst = arith.constant dense<0.000000e+00> : vector<2x256xf32>
    %3 = tpu.matmul %1, %2, %cst {dimension_numbers = #tpu.dot_dimension_numbers<[1], [0], [0], [1], [0, 0, 1, 1], [], []>} : vector<2x256xbf16>, vector<256x256xbf16>, vector<2x256xf32> -> vector<2x256xf32>
    %c0_3 = arith.constant 0 : index
    %c0_4 = arith.constant 0 : index
    %4 = vector.load %arg3[%c0_3, %c0_4] : memref<1x256xf32, #tpu.memory_space<vmem>>, vector<1x256xf32>
    %5 = vector.broadcast %4 : vector<1x256xf32> to vector<2x256xf32>
    %6 = arith.addf %3, %5 : vector<2x256xf32>
    %cst_5 = arith.constant 0.000000e+00 : f32
    %7 = vector.broadcast %cst_5 : f32 to vector<2x256xf32>
    %8 = arith.cmpf ogt, %6, %7 : vector<2x256xf32>
    %cst_6 = arith.constant 1.000000e-01 : f32
    %9 = vector.broadcast %cst_6 : f32 to vector<2x256xf32>
    %10 = arith.mulf %9, %6 : vector<2x256xf32>
    %11 = arith.select %8, %6, %10 : vector<2x256xi1>, vector<2x256xf32>
    %12 = arith.truncf %11 : vector<2x256xf32> to vector<2x256xbf16>
    %c0_7 = arith.constant 0 : index
    %c0_8 = arith.constant 0 : index
    %13 = vector.load %arg4[%c0_7, %c0_8] : memref<256x128xbf16, #tpu.memory_space<vmem>>, vector<256x128xbf16>
    %cst_9 = arith.constant dense<0.000000e+00> : vector<2x128xf32>
    %14 = tpu.matmul %12, %13, %cst_9 {dimension_numbers = #tpu.dot_dimension_numbers<[1], [0], [0], [1], [0, 0, 1, 1], [], []>} : vector<2x256xbf16>, vector<256x128xbf16>, vector<2x128xf32> -> vector<2x128xf32>
    %c0_10 = arith.constant 0 : index
    %c0_11 = arith.constant 0 : index
    %15 = vector.load %arg5[%c0_10, %c0_11] : memref<1x128xf32, #tpu.memory_space<vmem>>, vector<1x128xf32>
    %16 = vector.broadcast %15 : vector<1x128xf32> to vector<2x128xf32>
    %17 = arith.addf %14, %16 : vector<2x128xf32>
    %cst_12 = arith.constant 0.000000e+00 : f32
    %18 = vector.broadcast %cst_12 : f32 to vector<2x128xf32>
    %19 = arith.cmpf ogt, %17, %18 : vector<2x128xf32>
    %cst_13 = arith.constant 1.000000e-01 : f32
    %20 = vector.broadcast %cst_13 : f32 to vector<2x128xf32>
    %21 = arith.mulf %20, %17 : vector<2x128xf32>
    %22 = arith.select %19, %17, %21 : vector<2x128xi1>, vector<2x128xf32>
    %23 = arith.truncf %22 : vector<2x128xf32> to vector<2x128xbf16>
    %c0_14 = arith.constant 0 : index
    %c0_15 = arith.constant 0 : index
    %24 = vector.load %arg6[%c0_14, %c0_15] : memref<128x128xbf16, #tpu.memory_space<vmem>>, vector<128x128xbf16>
    %cst_16 = arith.constant dense<0.000000e+00> : vector<2x128xf32>
    %25 = tpu.matmul %23, %24, %cst_16 {dimension_numbers = #tpu.dot_dimension_numbers<[1], [0], [0], [1], [0, 0, 1, 1], [], []>} : vector<2x128xbf16>, vector<128x128xbf16>, vector<2x128xf32> -> vector<2x128xf32>
    %c0_17 = arith.constant 0 : index
    %c0_18 = arith.constant 0 : index
    %26 = vector.load %arg7[%c0_17, %c0_18] : memref<1x128xf32, #tpu.memory_space<vmem>>, vector<1x128xf32>
    %27 = vector.broadcast %26 : vector<1x128xf32> to vector<2x128xf32>
    %28 = arith.addf %25, %27 : vector<2x128xf32>
    %29 = arith.truncf %28 : vector<2x128xf32> to vector<2x128xbf16>
    %c0_19 = arith.constant 0 : index
    %c0_20 = arith.constant 0 : index
    %30 = vector.load %arg8[%c0_19, %c0_20] : memref<2x128xbf16, #tpu.memory_space<vmem>>, vector<2x128xbf16>
    tpu.vector_store %arg8[%c0_19, %c0_20], %29 {strides = array<i32>} : memref<2x128xbf16, #tpu.memory_space<vmem>>, vector<2x128xbf16>,
    return
  }
  func.func @transform_0(%arg0: i32) -> (i32, i32) {
    %c0_i32 = arith.constant 0 : i32
    %c0_i32_0 = arith.constant 0 : i32
    return %arg0, %c0_i32 : i32, i32
  }
  func.func @transform_1(%arg0: i32) -> (i32, i32) {
    %c0_i32 = arith.constant 0 : i32
    %c0_i32_0 = arith.constant 0 : i32
    %c0_i32_1 = arith.constant 0 : i32
    return %c0_i32, %c0_i32_0 : i32, i32
  }
  func.func @transform_2(%arg0: i32) -> (i32, i32) {
    %c0_i32 = arith.constant 0 : i32
    %c0_i32_0 = arith.constant 0 : i32
    %c0_i32_1 = arith.constant 0 : i32
    return %c0_i32, %c0_i32_0 : i32, i32
  }
  func.func @transform_3(%arg0: i32) -> (i32, i32) {
    %c0_i32 = arith.constant 0 : i32
    %c0_i32_0 = arith.constant 0 : i32
    %c0_i32_1 = arith.constant 0 : i32
    return %c0_i32, %c0_i32_0 : i32, i32
  }
  func.func @transform_4(%arg0: i32) -> (i32, i32) {
    %c0_i32 = arith.constant 0 : i32
    %c0_i32_0 = arith.constant 0 : i32
    %c0_i32_1 = arith.constant 0 : i32
    return %c0_i32, %c0_i32_0 : i32, i32
  }
  func.func @transform_5(%arg0: i32) -> (i32, i32) {
    %c0_i32 = arith.constant 0 : i32
    %c0_i32_0 = arith.constant 0 : i32
    %c0_i32_1 = arith.constant 0 : i32
    return %c0_i32, %c0_i32_0 : i32, i32
  }
  func.func @transform_6(%arg0: i32) -> (i32, i32) {
    %c0_i32 = arith.constant 0 : i32
    %c0_i32_0 = arith.constant 0 : i32
    %c0_i32_1 = arith.constant 0 : i32
    return %c0_i32, %c0_i32_0 : i32, i32
  }
  func.func @transform_7(%arg0: i32) -> (i32, i32) {
    %c0_i32 = arith.constant 0 : i32
    %c0_i32_0 = arith.constant 0 : i32
    return %arg0, %c0_i32 : i32, i32
  }
}

</mosaic_0001>

<llo_original>
// kernel: tpu_custom_call.1
$region0: #{tpu_custom_call.1}
  #allocation0 [shape = 'u32[]', space=smem, size = 0x4, offset = 0x4, fixed_abs, tag = 'smem constant byte address 0x4 - core index']
  #allocation1 [shape = 'u32[72,128]{1,0:T(1,128)}', space=vmem, size = 0x9000, scoped, tag = 'internal scratch']
  %s0 = inlined_call_operand.hbm [shape: f32[2,256], index: 0, kind: input, shape index: {}]
  %s1 = inlined_call_operand.hbm [shape: bf16[256,256], index: 1, kind: input, shape index: {}]
  %s2 = inlined_call_operand.hbm [shape: f32[1,256], index: 2, kind: input, shape index: {}]
  %s3 = inlined_call_operand.hbm [shape: bf16[256,128], index: 3, kind: input, shape index: {}]
  %s4 = inlined_call_operand.vmem [shape: f32[1,128], index: 4, kind: input, shape index: {}]
  %s5 = inlined_call_operand.hbm [shape: bf16[128,128], index: 5, kind: input, shape index: {}]
  %s6 = inlined_call_operand.vmem [shape: f32[1,128], index: 6, kind: input, shape index: {}]
  %s7 = inlined_call_operand.hbm [shape: bf16[2,128], index: 7, kind: output, shape index: {}]
  %s8 = sld [smem:[#allocation0]]
  $region58: #{tpu_custom_call.1} parent=0
    _
  %s10 = ssub.s32 1, %s8
  %s11 = scalar_select 0, %s10, %s8
  $region1: #{tpu_custom_call.1} parent=0
    #allocation2 [shape = 'u8[2048]{0}', space=vmem, size = 0x800, scoped, tag = 'input window, operand 0, single buffered']
    #allocation3 [shape = 's32[1]{0}', space=sflag, size = 0x4, scoped, tag = 'scoped memory for tpu_custom_call.1']
    #allocation4 [shape = 's32[1]{0}', space=sflag, size = 0x4, scoped, tag = 'scoped memory for tpu_custom_call.1']
    #allocation5 [shape = 'u8[131072]{0}', space=vmem, size = 0x20000, scoped, tag = 'input window, operand 1, single buffered']
    #allocation6 [shape = 's32[1]{0}', space=sflag, size = 0x4, scoped, tag = 'scoped memory for tpu_custom_call.1']
    #allocation7 [shape = 'u8[1024]{0}', space=vmem, size = 0x400, scoped, tag = 'input window, operand 2, single buffered']
    #allocation8 [shape = 'u8[65536]{0}', space=vmem, size = 0x10000, scoped, tag = 'input window, operand 3, single buffered']
    #allocation9 [shape = 's32[1]{0}', space=sflag, size = 0x4, scoped, tag = 'scoped memory for tpu_custom_call.1']
    #allocation10 [shape = 'u8[32768]{0}', space=vmem, size = 0x8000, scoped, tag = 'input window, operand 5, single buffered']
    #allocation11 [shape = 'u8[512]{0}', space=vmem, size = 0x400, scoped, tag = 'output window, operand 0, single buffered']
    %12 = vsyncpa [#allocation3], 0
    %13 = vsyncpa [#allocation6], 0
    %14 = vsyncpa [#allocation9], 0
    %15 = vsyncpa [#allocation4], 0
    // Predicated region
    $region2: #{tpu_custom_call.1} parent=1 // pred_check
      _
    $region3: #{tpu_custom_call.1} parent=1 // pred_check_branch
      %17 = sbr.rel (0) target = $region5
    $region4: #{tpu_custom_call.1} parent=1 // pred_region
      %19 = vsyncadd [#allocation3], 0
      %s21 = sshll.u32 %s0, 4
      %s22 = int_to_ptr.hbm [resolvable:$true] %s21
      %s23 = sshll.u32 [#allocation2], 4
      %s24 = int_to_ptr.vmem [resolvable:$true] %s23
      %26 = dma.hbm_to_vmem [thread:$0]  %s22, 64, %s24, [#allocation3]
    $region5: #{tpu_custom_call.1} parent=1 // pred_fallthru
      _
    // Predicated region
    $region6: #{tpu_custom_call.1} parent=1 // pred_check
      _
    $region7: #{tpu_custom_call.1} parent=1 // pred_check_branch
      %28 = sbr.rel (0) target = $region9
    $region8: #{tpu_custom_call.1} parent=1 // pred_region
      %30 = vsyncadd [#allocation6], 0
      %s31 = sshll.u32 %s1, 4
      %s32 = int_to_ptr.hbm [resolvable:$true] %s31
      %s33 = sshll.u32 [#allocation5], 4
      %s34 = int_to_ptr.vmem [resolvable:$true] %s33
      %39 = dma.hbm_to_vmem [thread:$0]  %s32, 4096, %s34, [#allocation6], 128, 128, 8
    $region9: #{tpu_custom_call.1} parent=1 // pred_fallthru
      _
    // Predicated region
    $region10: #{tpu_custom_call.1} parent=1 // pred_check
      _
    $region11: #{tpu_custom_call.1} parent=1 // pred_check_branch
      %41 = sbr.rel (0) target = $region13
    $region12: #{tpu_custom_call.1} parent=1 // pred_region
      %43 = vsyncadd [#allocation6], 0
      %s45 = sshll.u32 %s2, 4
      %s46 = int_to_ptr.hbm [resolvable:$true] %s45
      %s47 = sshll.u32 [#allocation7], 4
      %s48 = int_to_ptr.vmem [resolvable:$true] %s47
      %50 = dma.hbm_to_vmem [thread:$0]  %s46, 32, %s48, [#allocation6]
    $region13: #{tpu_custom_call.1} parent=1 // pred_fallthru
      _
    // Predicated region
    $region14: #{tpu_custom_call.1} parent=1 // pred_check
      _
    $region15: #{tpu_custom_call.1} parent=1 // pred_check_branch
      %52 = sbr.rel (0) target = $region17
    $region16: #{tpu_custom_call.1} parent=1 // pred_region
      %54 = vsyncadd [#allocation9], 0
      %s55 = sshll.u32 %s3, 4
      %s56 = int_to_ptr.hbm [resolvable:$true] %s55
      %s57 = sshll.u32 [#allocation8], 4
      %s58 = int_to_ptr.vmem [resolvable:$true] %s57
      %63 = dma.hbm_to_vmem [thread:$0]  %s56, 2048, %s58, [#allocation9], 64, 64, 4
    $region17: #{tpu_custom_call.1} parent=1 // pred_fallthru
      _
    // Predicated region
    $region18: #{tpu_custom_call.1} parent=1 // pred_check
      _
    $region19: #{tpu_custom_call.1} parent=1 // pred_check_branch
      %65 = sbr.rel (0) target = $region21
    $region20: #{tpu_custom_call.1} parent=1 // pred_region
      _
    $region21: #{tpu_custom_call.1} parent=1 // pred_fallthru
      _
    // Predicated region
    $region22: #{tpu_custom_call.1} parent=1 // pred_check
      _
    $region23: #{tpu_custom_call.1} parent=1 // pred_check_branch
      %67 = sbr.rel (0) target = $region25
    $region24: #{tpu_custom_call.1} parent=1 // pred_region
      %69 = vsyncadd [#allocation9], 0
      %s70 = sshll.u32 %s5, 4
      %s71 = int_to_ptr.hbm [resolvable:$true] %s70
      %s72 = sshll.u32 [#allocation10], 4
      %s73 = int_to_ptr.vmem [resolvable:$true] %s72
      %78 = dma.hbm_to_vmem [thread:$0]  %s71, 1024, %s73, [#allocation9], 64, 64, 4
    $region25: #{tpu_custom_call.1} parent=1 // pred_fallthru
      _
    // Predicated region
    $region26: #{tpu_custom_call.1} parent=1 // pred_check
      _
    $region27: #{tpu_custom_call.1} parent=1 // pred_check_branch
      %80 = sbr.rel (0) target = $region29
    $region28: #{tpu_custom_call.1} parent=1 // pred_region
      _
    $region29: #{tpu_custom_call.1} parent=1 // pred_fallthru
      _
    // Predicated region
    $region30: #{tpu_custom_call.1} parent=1 // pred_check
      _
    $region31: #{tpu_custom_call.1} parent=1 // pred_check_branch
      %82 = sbr.rel (0) target = $region33
    $region32: #{tpu_custom_call.1} parent=1 // pred_region
      %84 = dma.done [#allocation3], 64
    $region33: #{tpu_custom_call.1} parent=1 // pred_fallthru
      _
    // Predicated region
    $region34: #{tpu_custom_call.1} parent=1 // pred_check
      _
    $region35: #{tpu_custom_call.1} parent=1 // pred_check_branch
      %86 = sbr.rel (0) target = $region37
    $region36: #{tpu_custom_call.1} parent=1 // pred_region
      %88 = dma.done [#allocation6], 4096
    $region37: #{tpu_custom_call.1} parent=1 // pred_fallthru
      _
    // Predicated region
    $region38: #{tpu_custom_call.1} parent=1 // pred_check
      _
    $region39: #{tpu_custom_call.1} parent=1 // pred_check_branch
      %90 = sbr.rel (0) target = $region41
    $region40: #{tpu_custom_call.1} parent=1 // pred_region
      %92 = dma.done [#allocation6], 32
    $region41: #{tpu_custom_call.1} parent=1 // pred_fallthru
      _
    // Predicated region
    $region42: #{tpu_custom_call.1} parent=1 // pred_check
      _
    $region43: #{tpu_custom_call.1} parent=1 // pred_check_branch
      %94 = sbr.rel (0) target = $region45
    $region44: #{tpu_custom_call.1} parent=1 // pred_region
      %96 = dma.done [#allocation9], 2048
    $region45: #{tpu_custom_call.1} parent=1 // pred_fallthru
      _
    // Predicated region
    $region46: #{tpu_custom_call.1} parent=1 // pred_check
      _
    $region47: #{tpu_custom_call.1} parent=1 // pred_check_branch
      %98 = sbr.rel (0) target = $region49
    $region48: #{tpu_custom_call.1} parent=1 // pred_region
      %100 = dma.done [#allocation9], 1024
    $region49: #{tpu_custom_call.1} parent=1 // pred_fallthru
      _
    %v101 = vld [vmem:[#allocation2] sm:$0xf]
    %103 = vst [vmem:[#allocation1] ss:$4 sm:$0xff] %v101
    %v104 = vld.sshfl [vmem:[#allocation1] sm:$0xff pattern:$0x73625140]
    %v105 = vld.sshfl [vmem:[#allocation1 + $0x8] sm:$0xff pattern:$0x73625140]
    %v108 = vpack.c.bf16 %v104, %v104
    %v109 = vpack.c.bf16 %v105, %v105
    %v110 = vld [vmem:[#allocation5] sm:$0xff]
    %v111 = vld [vmem:[#allocation5 + $0x8] sm:$0xff]
    %v112 = vld [vmem:[#allocation5 + $0x10] sm:$0xff]
    %v113 = vld [vmem:[#allocation5 + $0x18] sm:$0xff]
    %v114 = vld [vmem:[#allocation5 + $0x20] sm:$0xff]
    %v115 = vld [vmem:[#allocation5 + $0x28] sm:$0xff]
    %v116 = vld [vmem:[#allocation5 + $0x30] sm:$0xff]
    %v117 = vld [vmem:[#allocation5 + $0x38] sm:$0xff]
    %v118 = vld [vmem:[#allocation5 + $0x40] sm:$0xff]
    %v119 = vld [vmem:[#allocation5 + $0x48] sm:$0xff]
    %v120 = vld [vmem:[#allocation5 + $0x50] sm:$0xff]
    %v121 = vld [vmem:[#allocation5 + $0x58] sm:$0xff]
    %v122 = vld [vmem:[#allocation5 + $0x60] sm:$0xff]
    %v123 = vld [vmem:[#allocation5 + $0x68] sm:$0xff]
    %v124 = vld [vmem:[#allocation5 + $0x70] sm:$0xff]
    %v125 = vld [vmem:[#allocation5 + $0x78] sm:$0xff]
    %v126 = vld [vmem:[#allocation5 + $0x80] sm:$0xff]
    %v127 = vld [vmem:[#allocation5 + $0x88] sm:$0xff]
    %v128 = vld [vmem:[#allocation5 + $0x90] sm:$0xff]
    %v129 = vld [vmem:[#allocation5 + $0x98] sm:$0xff]
    %v130 = vld [vmem:[#allocation5 + $0xa0] sm:$0xff]
    %v131 = vld [vmem:[#allocation5 + $0xa8] sm:$0xff]
    %v132 = vld [vmem:[#allocation5 + $0xb0] sm:$0xff]
    %v133 = vld [vmem:[#allocation5 + $0xb8] sm:$0xff]
    %v134 = vld [vmem:[#allocation5 + $0xc0] sm:$0xff]
    %v135 = vld [vmem:[#allocation5 + $0xc8] sm:$0xff]
    %v136 = vld [vmem:[#allocation5 + $0xd0] sm:$0xff]
    %v137 = vld [vmem:[#allocation5 + $0xd8] sm:$0xff]
    %v138 = vld [vmem:[#allocation5 + $0xe0] sm:$0xff]
    %v139 = vld [vmem:[#allocation5 + $0xe8] sm:$0xff]
    %v140 = vld [vmem:[#allocation5 + $0xf0] sm:$0xff]
    %v141 = vld [vmem:[#allocation5 + $0xf8] sm:$0xff]
    %v142 = vld [vmem:[#allocation7] sm:$0x3]
    %v144 = vperm.slane %v142, 0
    %v145 = vperm.slane %v142, 1
    %v180 = vunpack.c.l.b16 %v110
    %v181 = vunpack.c.h.b16 %v110
    %v182 = vunpack.c.l.b16 %v111
    %v183 = vunpack.c.h.b16 %v111
    %v184 = vunpack.c.l.b16 %v112
    %v185 = vunpack.c.h.b16 %v112
    %v186 = vunpack.c.l.b16 %v113
    %v187 = vunpack.c.h.b16 %v113
    %v188 = vunpack.c.l.b16 %v114
    %v189 = vunpack.c.h.b16 %v114
    %v190 = vunpack.c.l.b16 %v115
    %v191 = vunpack.c.h.b16 %v115
    %v192 = vunpack.c.l.b16 %v116
    %v193 = vunpack.c.h.b16 %v116
    %v194 = vunpack.c.l.b16 %v117
    %v195 = vunpack.c.h.b16 %v117
    %v196 = vunpack.c.l.b16 %v118
    %v197 = vunpack.c.h.b16 %v118
    %v198 = vunpack.c.l.b16 %v119
    %v199 = vunpack.c.h.b16 %v119
    %v200 = vunpack.c.l.b16 %v120
    %v201 = vunpack.c.h.b16 %v120
    %v202 = vunpack.c.l.b16 %v121
    %v203 = vunpack.c.h.b16 %v121
    %v204 = vunpack.c.l.b16 %v122
    %v205 = vunpack.c.h.b16 %v122
    %v206 = vunpack.c.l.b16 %v123
    %v207 = vunpack.c.h.b16 %v123
    %v208 = vunpack.c.l.b16 %v124
    %v209 = vunpack.c.h.b16 %v124
    %v210 = vunpack.c.l.b16 %v125
    %v211 = vunpack.c.h.b16 %v125
    %v212 = vunpack.c.l.b16 %v126
    %v213 = vunpack.c.h.b16 %v126
    %v214 = vunpack.c.l.b16 %v127
    %v215 = vunpack.c.h.b16 %v127
    %v216 = vunpack.c.l.b16 %v128
    %v217 = vunpack.c.h.b16 %v128
    %v218 = vunpack.c.l.b16 %v129
    %v219 = vunpack.c.h.b16 %v129
    %v220 = vunpack.c.l.b16 %v130
    %v221 = vunpack.c.h.b16 %v130
    %v222 = vunpack.c.l.b16 %v131
    %v223 = vunpack.c.h.b16 %v131
    %v224 = vunpack.c.l.b16 %v132
    %v225 = vunpack.c.h.b16 %v132
    %v226 = vunpack.c.l.b16 %v133
    %v227 = vunpack.c.h.b16 %v133
    %v228 = vunpack.c.l.b16 %v134
    %v229 = vunpack.c.h.b16 %v134
    %v230 = vunpack.c.l.b16 %v135
    %v231 = vunpack.c.h.b16 %v135
    %v232 = vunpack.c.l.b16 %v136
    %v233 = vunpack.c.h.b16 %v136
    %v234 = vunpack.c.l.b16 %v137
    %v235 = vunpack.c.h.b16 %v137
    %v236 = vunpack.c.l.b16 %v138
    %v237 = vunpack.c.h.b16 %v138
    %v238 = vunpack.c.l.b16 %v139
    %v239 = vunpack.c.h.b16 %v139
    %v240 = vunpack.c.l.b16 %v140
    %v241 = vunpack.c.h.b16 %v140
    %v242 = vunpack.c.l.b16 %v141
    %v243 = vunpack.c.h.b16 %v141
    %v244 = vpack.c.b16 %v182, %v180
    %v245 = vpack.c.b16 %v183, %v181
    %v246 = vpack.c.b16 %v186, %v184
    %v247 = vpack.c.b16 %v187, %v185
    %v248 = vpack.c.b16 %v190, %v188
    %v249 = vpack.c.b16 %v191, %v189
    %v250 = vpack.c.b16 %v194, %v192
    %v251 = vpack.c.b16 %v195, %v193
    %v252 = vpack.c.b16 %v198, %v196
    %v253 = vpack.c.b16 %v199, %v197
    %v254 = vpack.c.b16 %v202, %v200
    %v255 = vpack.c.b16 %v203, %v201
    %v256 = vpack.c.b16 %v206, %v204
    %v257 = vpack.c.b16 %v207, %v205
    %v258 = vpack.c.b16 %v210, %v208
    %v259 = vpack.c.b16 %v211, %v209
    %v260 = vpack.c.b16 %v214, %v212
    %v261 = vpack.c.b16 %v215, %v213
    %v262 = vpack.c.b16 %v218, %v216
    %v263 = vpack.c.b16 %v219, %v217
    %v264 = vpack.c.b16 %v222, %v220
    %v265 = vpack.c.b16 %v223, %v221
    %v266 = vpack.c.b16 %v226, %v224
    %v267 = vpack.c.b16 %v227, %v225
    %v268 = vpack.c.b16 %v230, %v228
    %v269 = vpack.c.b16 %v231, %v229
    %v270 = vpack.c.b16 %v234, %v232
    %v271 = vpack.c.b16 %v235, %v233
    %v272 = vpack.c.b16 %v238, %v236
    %v273 = vpack.c.b16 %v239, %v237
    %v274 = vpack.c.b16 %v242, %v240
    %v275 = vpack.c.b16 %v243, %v241
    %308 = vmatpush.bf16.msra.mxu0 %v258
    %309 = vmatpush.bf16.msra.mxu0 %v256
    %310 = vmatpush.bf16.msra.mxu0 %v254
    %311 = vmatpush.bf16.msra.mxu0 %v252
    %312 = vmatpush.bf16.msra.mxu0 %v250
    %313 = vmatpush.bf16.msra.mxu0 %v248
    %314 = vmatpush.bf16.msra.mxu0 %v246
    %315 = vmatpush.bf16.msra.mxu0 %v244
    %316 = vmatmul.bf16.gmra.mxu0 %v108
    %v317 = vpop.f32.mrf.mxu0
    %v318 = vadd.f32 %v144, %v317
    %v319 = vpop.f32.mrf.mxu0
    %320 = vdwg.mxu0
    %321 = vmatpush.bf16.msra.mxu0 %v274
    %322 = vmatpush.bf16.msra.mxu0 %v272
    %323 = vmatpush.bf16.msra.mxu0 %v270
    %324 = vmatpush.bf16.msra.mxu0 %v268
    %325 = vmatpush.bf16.msra.mxu0 %v266
    %326 = vmatpush.bf16.msra.mxu0 %v264
    %327 = vmatpush.bf16.msra.mxu0 %v262
    %328 = vmatpush.bf16.msra.mxu0 %v260
    %329 = vmatmul.bf16.gmra.mxu0 %v109
    %v330 = vpop.f32.mrf.mxu0
    %v331 = vadd.f32 %v318, %v330
    %v332 = vpop.f32.mrf.mxu0
    %333 = vdwg.mxu0
    %334 = vmatpush.bf16.msra.mxu0 %v259
    %335 = vmatpush.bf16.msra.mxu0 %v257
    %336 = vmatpush.bf16.msra.mxu0 %v255
    %337 = vmatpush.bf16.msra.mxu0 %v253
    %338 = vmatpush.bf16.msra.mxu0 %v251
    %339 = vmatpush.bf16.msra.mxu0 %v249
    %340 = vmatpush.bf16.msra.mxu0 %v247
    %341 = vmatpush.bf16.msra.mxu0 %v245
    %342 = vmatmul.bf16.gmra.mxu0 %v108
    %v343 = vpop.f32.mrf.mxu0
    %v344 = vadd.f32 %v145, %v343
    %v345 = vpop.f32.mrf.mxu0
    %346 = vdwg.mxu0
    %347 = vmatpush.bf16.msra.mxu0 %v275
    %348 = vmatpush.bf16.msra.mxu0 %v273
    %349 = vmatpush.bf16.msra.mxu0 %v271
    %350 = vmatpush.bf16.msra.mxu0 %v269
    %351 = vmatpush.bf16.msra.mxu0 %v267
    %352 = vmatpush.bf16.msra.mxu0 %v265
    %353 = vmatpush.bf16.msra.mxu0 %v263
    %354 = vmatpush.bf16.msra.mxu0 %v261
    %355 = vmatmul.bf16.gmra.mxu0 %v109
    %v356 = vpop.f32.mrf.mxu0
    %v357 = vadd.f32 %v344, %v356
    %v358 = vpop.f32.mrf.mxu0
    %359 = vdwg.mxu0
    %vm360 = vcmp.gt.f32.partialorder %v331, 0.0
    %vm361 = vcmp.gt.f32.partialorder %v357, 0.0
    %v362 = vmul.f32 %v331, 0.1
    %v363 = vmul.f32 %v357, 0.1
    %v364 = vsel %vm360, %v331, %v362
    %v365 = vsel %vm361, %v357, %v363
    %v366 = vpack.c.bf16 %v364, %v364
    %v367 = vpack.c.bf16 %v365, %v365
    %v368 = vld [vmem:[#allocation8] sm:$0xf]
    %v369 = vld [vmem:[#allocation8 + $0x4] sm:$0xf]
    %v370 = vld [vmem:[#allocation8 + $0x8] sm:$0xf]
    %v371 = vld [vmem:[#allocation8 + $0xc] sm:$0xf]
    %v372 = vld [vmem:[#allocation8 + $0x10] sm:$0xf]
    %v373 = vld [vmem:[#allocation8 + $0x14] sm:$0xf]
    %v374 = vld [vmem:[#allocation8 + $0x18] sm:$0xf]
    %v375 = vld [vmem:[#allocation8 + $0x1c] sm:$0xf]
    %v376 = vld [vmem:[#allocation8 + $0x20] sm:$0xf]
    %v377 = vld [vmem:[#allocation8 + $0x24] sm:$0xf]
    %v378 = vld [vmem:[#allocation8 + $0x28] sm:$0xf]
    %v379 = vld [vmem:[#allocation8 + $0x2c] sm:$0xf]
    %v380 = vld [vmem:[#allocation8 + $0x30] sm:$0xf]
    %v381 = vld [vmem:[#allocation8 + $0x34] sm:$0xf]
    %v382 = vld [vmem:[#allocation8 + $0x38] sm:$0xf]
    %v383 = vld [vmem:[#allocation8 + $0x3c] sm:$0xf]
    %v384 = vld [vmem:[#allocation8 + $0x40] sm:$0xf]
    %v385 = vld [vmem:[#allocation8 + $0x44] sm:$0xf]
    %v386 = vld [vmem:[#allocation8 + $0x48] sm:$0xf]
    %v387 = vld [vmem:[#allocation8 + $0x4c] sm:$0xf]
    %v388 = vld [vmem:[#allocation8 + $0x50] sm:$0xf]
    %v389 = vld [vmem:[#allocation8 + $0x54] sm:$0xf]
    %v390 = vld [vmem:[#allocation8 + $0x58] sm:$0xf]
    %v391 = vld [vmem:[#allocation8 + $0x5c] sm:$0xf]
    %v392 = vld [vmem:[#allocation8 + $0x60] sm:$0xf]
    %v393 = vld [vmem:[#allocation8 + $0x64] sm:$0xf]
    %v394 = vld [vmem:[#allocation8 + $0x68] sm:$0xf]
    %v395 = vld [vmem:[#allocation8 + $0x6c] sm:$0xf]
    %v396 = vld [vmem:[#allocation8 + $0x70] sm:$0xf]
    %v397 = vld [vmem:[#allocation8 + $0x74] sm:$0xf]
    %v398 = vld [vmem:[#allocation8 + $0x78] sm:$0xf]
    %v399 = vld [vmem:[#allocation8 + $0x7c] sm:$0xf]
    %v400 = vld [vmem:[%s4] sm:$0x1]
    %v402 = vperm.slane %v400, 0
    %v436 = vunpack.c.l.b16 %v368
    %v437 = vunpack.c.l.b16 %v369
    %v438 = vunpack.c.l.b16 %v370
    %v439 = vunpack.c.l.b16 %v371
    %v440 = vunpack.c.l.b16 %v372
    %v441 = vunpack.c.l.b16 %v373
    %v442 = vunpack.c.l.b16 %v374
    %v443 = vunpack.c.l.b16 %v375
    %v444 = vunpack.c.l.b16 %v376
    %v445 = vunpack.c.l.b16 %v377
    %v446 = vunpack.c.l.b16 %v378
    %v447 = vunpack.c.l.b16 %v379
    %v448 = vunpack.c.l.b16 %v380
    %v449 = vunpack.c.l.b16 %v381
    %v450 = vunpack.c.l.b16 %v382
    %v451 = vunpack.c.l.b16 %v383
    %v452 = vunpack.c.l.b16 %v384
    %v453 = vunpack.c.l.b16 %v385
    %v454 = vunpack.c.l.b16 %v386
    %v455 = vunpack.c.l.b16 %v387
    %v456 = vunpack.c.l.b16 %v388
    %v457 = vunpack.c.l.b16 %v389
    %v458 = vunpack.c.l.b16 %v390
    %v459 = vunpack.c.l.b16 %v391
    %v460 = vunpack.c.l.b16 %v392
    %v461 = vunpack.c.l.b16 %v393
    %v462 = vunpack.c.l.b16 %v394
    %v463 = vunpack.c.l.b16 %v395
    %v464 = vunpack.c.l.b16 %v396
    %v465 = vunpack.c.l.b16 %v397
    %v466 = vunpack.c.l.b16 %v398
    %v467 = vunpack.c.l.b16 %v399
    %v468 = vpack.c.b16 %v437, %v436
    %v469 = vpack.c.b16 %v439, %v438
    %v470 = vpack.c.b16 %v441, %v440
    %v471 = vpack.c.b16 %v443, %v442
    %v472 = vpack.c.b16 %v445, %v444
    %v473 = vpack.c.b16 %v447, %v446
    %v474 = vpack.c.b16 %v449, %v448
    %v475 = vpack.c.b16 %v451, %v450
    %v476 = vpack.c.b16 %v453, %v452
    %v477 = vpack.c.b16 %v455, %v454
    %v478 = vpack.c.b16 %v457, %v456
    %v479 = vpack.c.b16 %v459, %v458
    %v480 = vpack.c.b16 %v461, %v460
    %v481 = vpack.c.b16 %v463, %v462
    %v482 = vpack.c.b16 %v465, %v464
    %v483 = vpack.c.b16 %v467, %v466
    %500 = vmatpush.bf16.msra.mxu0 %v475
    %501 = vmatpush.bf16.msra.mxu0 %v474
    %502 = vmatpush.bf16.msra.mxu0 %v473
    %503 = vmatpush.bf16.msra.mxu0 %v472
    %504 = vmatpush.bf16.msra.mxu0 %v471
    %505 = vmatpush.bf16.msra.mxu0 %v470
    %506 = vmatpush.bf16.msra.mxu0 %v469
    %507 = vmatpush.bf16.msra.mxu0 %v468
    %508 = vmatmul.bf16.gmra.mxu0 %v366
    %v509 = vpop.f32.mrf.mxu0
    %v510 = vadd.f32 %v402, %v509
    %v511 = vpop.f32.mrf.mxu0
    %512 = vdwg.mxu0
    %513 = vmatpush.bf16.msra.mxu0 %v483
    %514 = vmatpush.bf16.msra.mxu0 %v482
    %515 = vmatpush.bf16.msra.mxu0 %v481
    %516 = vmatpush.bf16.msra.mxu0 %v480
    %517 = vmatpush.bf16.msra.mxu0 %v479
    %518 = vmatpush.bf16.msra.mxu0 %v478
    %519 = vmatpush.bf16.msra.mxu0 %v477
    %520 = vmatpush.bf16.msra.mxu0 %v476
    %521 = vmatmul.bf16.gmra.mxu0 %v367
    %v522 = vpop.f32.mrf.mxu0
    %v523 = vadd.f32 %v510, %v522
    %v524 = vpop.f32.mrf.mxu0
    %525 = vdwg.mxu0
    %vm526 = vcmp.gt.f32.partialorder %v523, 0.0
    %v527 = vmul.f32 %v523, 0.1
    %v528 = vsel %vm526, %v523, %v527
    %v529 = vpack.c.bf16 %v528, %v528
    %v530 = vld [vmem:[#allocation10] sm:$0xf]
    %v531 = vld [vmem:[#allocation10 + $0x4] sm:$0xf]
    %v532 = vld [vmem:[#allocation10 + $0x8] sm:$0xf]
    %v533 = vld [vmem:[#allocation10 + $0xc] sm:$0xf]
    %v534 = vld [vmem:[#allocation10 + $0x10] sm:$0xf]
    %v535 = vld [vmem:[#allocation10 + $0x14] sm:$0xf]
    %v536 = vld [vmem:[#allocation10 + $0x18] sm:$0xf]
    %v537 = vld [vmem:[#allocation10 + $0x1c] sm:$0xf]
    %v538 = vld [vmem:[#allocation10 + $0x20] sm:$0xf]
    %v539 = vld [vmem:[#allocation10 + $0x24] sm:$0xf]
    %v540 = vld [vmem:[#allocation10 + $0x28] sm:$0xf]
    %v541 = vld [vmem:[#allocation10 + $0x2c] sm:$0xf]
    %v542 = vld [vmem:[#allocation10 + $0x30] sm:$0xf]
    %v543 = vld [vmem:[#allocation10 + $0x34] sm:$0xf]
    %v544 = vld [vmem:[#allocation10 + $0x38] sm:$0xf]
    %v545 = vld [vmem:[#allocation10 + $0x3c] sm:$0xf]
    %v546 = vld [vmem:[%s6] sm:$0x1]
    %v548 = vperm.slane %v546, 0
    %v566 = vunpack.c.l.b16 %v530
    %v567 = vunpack.c.l.b16 %v531
    %v568 = vunpack.c.l.b16 %v532
    %v569 = vunpack.c.l.b16 %v533
    %v570 = vunpack.c.l.b16 %v534
    %v571 = vunpack.c.l.b16 %v535
    %v572 = vunpack.c.l.b16 %v536
    %v573 = vunpack.c.l.b16 %v537
    %v574 = vunpack.c.l.b16 %v538
    %v575 = vunpack.c.l.b16 %v539
    %v576 = vunpack.c.l.b16 %v540
    %v577 = vunpack.c.l.b16 %v541
    %v578 = vunpack.c.l.b16 %v542
    %v579 = vunpack.c.l.b16 %v543
    %v580 = vunpack.c.l.b16 %v544
    %v581 = vunpack.c.l.b16 %v545
    %v582 = vpack.c.b16 %v567, %v566
    %v583 = vpack.c.b16 %v569, %v568
    %v584 = vpack.c.b16 %v571, %v570
    %v585 = vpack.c.b16 %v573, %v572
    %v586 = vpack.c.b16 %v575, %v574
    %v587 = vpack.c.b16 %v577, %v576
    %v588 = vpack.c.b16 %v579, %v578
    %v589 = vpack.c.b16 %v581, %v580
    %598 = vmatpush.bf16.msra.mxu0 %v589
    %599 = vmatpush.bf16.msra.mxu0 %v588
    %600 = vmatpush.bf16.msra.mxu0 %v587
    %601 = vmatpush.bf16.msra.mxu0 %v586
    %602 = vmatpush.bf16.msra.mxu0 %v585
    %603 = vmatpush.bf16.msra.mxu0 %v584
    %604 = vmatpush.bf16.msra.mxu0 %v583
    %605 = vmatpush.bf16.msra.mxu0 %v582
    %606 = vmatmul.bf16.gmra.mxu0 %v529
    %v607 = vpop.f32.mrf.mxu0
    %v608 = vadd.f32 %v548, %v607
    %v609 = vpop.f32.mrf.mxu0
    %610 = vdwg.mxu0
    %v611 = vpack.c.bf16 %v608, %v608
    %612 = vst [vmem:[#allocation11] sm:$0x1] %v611
    // Predicated region
    $region50: #{tpu_custom_call.1} parent=1 // pred_check
      _
    $region51: #{tpu_custom_call.1} parent=1 // pred_check_branch
      %614 = sbr.rel (0) target = $region53
    $region52: #{tpu_custom_call.1} parent=1 // pred_region
      %616 = vsyncadd [#allocation4], 0
      %s618 = sshll.u32 [#allocation11], 4
      %s619 = int_to_ptr.vmem [resolvable:$true] %s618
      %s620 = sshll.u32 %s7, 4
      %s621 = int_to_ptr.hbm [resolvable:$true] %s620
      %623 = dma.vmem_to_hbm [thread:$0]  %s619, 16, %s621, [#allocation4]
    $region53: #{tpu_custom_call.1} parent=1 // pred_fallthru
      _
    // Predicated region
    $region54: #{tpu_custom_call.1} parent=1 // pred_check
      _
    $region55: #{tpu_custom_call.1} parent=1 // pred_check_branch
      %625 = sbr.rel (0) target = $region57
    $region56: #{tpu_custom_call.1} parent=1 // pred_region
      %627 = dma.done [#allocation4], 16
    $region57: #{tpu_custom_call.1} parent=1 // pred_fallthru
      _
    %628 = vsyncpa [#allocation3], 1
    %629 = vsyncpa [#allocation6], 1
    %630 = vsyncpa [#allocation9], 1
    %631 = vsyncpa [#allocation4], 1

</llo_original>
